<compile_context>
chip_gen: v7x
topology: tpu7x:2x2x1
jax: 0.10.0
libtpu: 0.0.40
codegen_flags: <defaults>
</compile_context>

<pallas_src>
import jax
import jax.numpy as jnp
from jax.experimental import pallas as pl
from jax.experimental.pallas import tpu as pltpu

NUM_CLASSES = 9
PADDED_CLASSES = 128          # lane-dense output width
IN_CH = 128
SEQ_LEN = 1
EPS = 1e-5
NEG_INF = -1e30               # bias for padded logit columns (kept in f32)


def _round_up(n, m):
    return ((n + m - 1) // m) * m


# --------------------------------------------------------------------------
# Kernel
# --------------------------------------------------------------------------
def cnn_kernel(x_ref,
               w1_ref, w2_ref, w3_ref, wf1_ref, wf2_ref, wf3_ref, wf4_ref,
               bias_ref, out_ref):
    f32 = jnp.float32

    def mm(h, w_ref, b):
        w = w_ref[...]
        # Cast activations to the weight dtype (bf16 path uses the native
        # bf16 MXU); accumulate in f32; bias add / ReLU in f32.
        return jnp.dot(h.astype(w.dtype), w, preferred_element_type=f32) + b

    # Packed bias blob: one small f32 VMEM tile, sliced per layer.  Biases
    # stay f32 so the -1e30 pad-column trick and log_softmax remain f32.
    b1  = bias_ref[0:1, 0:128]   # conv1 (padded to 128)
    b2  = bias_ref[1:2, 0:128]   # conv2 (BN1 folded in)
    b3  = bias_ref[2:3, :]       # conv3 (BN2 folded in), 256 wide
    bf1 = bias_ref[3:4, :]       # fc1   (BN3 folded in), 256 wide
    bf2 = bias_ref[4:5, 0:128]   # fc2
    bf3 = bias_ref[5:6, 0:128]   # fc3   (padded to 128)
    bf4 = bias_ref[6:7, 0:128]   # fc4   (cols 9..127 = -1e30)

    h = x_ref[...]                                    # (bt, 128) compute dtype

    # conv1 (center tap) + relu      [BN1 folded into w2; pool1 identity]
    h = jnp.maximum(mm(h, w1_ref, b1), 0.0)
    # conv2 + relu                   [BN2 folded into w3; pool2 identity]
    h = jnp.maximum(mm(h, w2_ref, b2), 0.0)
    # conv3 + relu                   [BN3 folded into fc1; pool3 identity]
    h = jnp.maximum(mm(h, w3_ref, b3), 0.0)
    # flatten is a no-op (L == 1); fc1..fc3 + relu (dropout eval = identity)
    h = jnp.maximum(mm(h, wf1_ref, bf1), 0.0)
    h = jnp.maximum(mm(h, wf2_ref, bf2), 0.0)
    h = jnp.maximum(mm(h, wf3_ref, bf3), 0.0)

    # fc4 (output lane-padded to 128, fake columns biased to -1e30)
    logits = mm(h, wf4_ref, bf4)                      # (bt, 128) f32

    # log_softmax over classes in f32; padded columns add exp(-1e30 - m) == 0.
    m = jnp.max(logits, axis=-1, keepdims=True)
    z = logits - m
    lse = jnp.log(jnp.sum(jnp.exp(z), axis=-1, keepdims=True))
    out_ref[...] = (z - lse).astype(out_ref.dtype)


# --------------------------------------------------------------------------
# Parameters
# --------------------------------------------------------------------------
def init_raw_params(key):
    """PyTorch-style uniform init (conv = center tap only) + randomized
    BatchNorm running stats so the BN fold is actually exercised."""
    def lin(k, fan_in, din, dout):
        k1, k2 = jax.random.split(k)
        bound = 1.0 / jnp.sqrt(jnp.float32(fan_in))
        w = jax.random.uniform(k1, (din, dout), jnp.float32, -bound, bound)
        b = jax.random.uniform(k2, (1, dout), jnp.float32, -bound, bound)
        return w, b

    def bn(k, c):  # BatchNorm1d eval: (gamma, beta, running mean/var) -> affine
        kg, kb, km, kv = jax.random.split(k, 4)
        gamma = jax.random.uniform(kg, (1, c), jnp.float32, 0.5, 1.5)
        beta = jax.random.uniform(kb, (1, c), jnp.float32, -0.5, 0.5)
        mean = jax.random.uniform(km, (1, c), jnp.float32, -0.5, 0.5)
        var = jax.random.uniform(kv, (1, c), jnp.float32, 0.5, 1.5)
        scale = gamma / jnp.sqrt(var + EPS)
        shift = beta - mean * scale
        return scale, shift

    keys = jax.random.split(key, 10)
    w1, b1 = lin(keys[0], IN_CH * 3, IN_CH, 64)    # conv1 center tap
    w2, b2 = lin(keys[1], 64 * 3, 64, 128)         # conv2 center tap
    w3, b3 = lin(keys[2], 128 * 3, 128, 256)       # conv3 center tap
    wf1, bf1 = lin(keys[3], 256, 256, 256)
    wf2, bf2 = lin(keys[4], 256, 256, 128)
    wf3, bf3 = lin(keys[5], 128, 128, 64)
    wf4, bf4 = lin(keys[6], 64, 64, NUM_CLASSES)
    s1, t1 = bn(keys[7], 64)
    s2, t2 = bn(keys[8], 128)
    s3, t3 = bn(keys[9], 256)
    return (w1, b1, w2, b2, w3, b3, wf1, bf1, wf2, bf2, wf3, bf3, wf4, bf4,
            s1, t1, s2, t2, s3, t3)


def pack_kernel_params(raw, dtype=jnp.bfloat16):
    """Fold BN into the next layer, pad to lane-dense shapes, pack biases."""
    (w1, b1, w2, b2, w3, b3, wf1, bf1, wf2, bf2, wf3, bf3, wf4, bf4,
     s1, t1, s2, t2, s3, t3) = raw

    # Model order is conv -> ReLU -> BatchNorm (cTrain.py), so fold the
    # post-ReLU BN affine into the NEXT layer's matmul:
    #   (h*s + t) @ W + b  ==  h @ (diag(s) @ W) + (b + t @ W)
    w2f = s1.reshape(-1, 1) * w2
    b2f = b2 + t1 @ w2
    w3f = s2.reshape(-1, 1) * w3
    b3f = b3 + t2 @ w3
    wf1f = s3.reshape(-1, 1) * wf1
    bf1f = bf1 + t3 @ wf1

    # Pad 64-wide dims to 128 lanes (zero rows/cols keep the math identical).
    w1p = jnp.pad(w1, ((0, 0), (0, 64)))                     # (128, 128)
    b1p = jnp.pad(b1, ((0, 0), (0, 64)))                     # (1, 128)
    w2p = jnp.pad(w2f, ((0, 64), (0, 0)))                    # (128, 128)
    wf3p = jnp.pad(wf3, ((0, 0), (0, 64)))                   # (128, 128)
    bf3p = jnp.pad(bf3, ((0, 0), (0, 64)))                   # (1, 128)
    wf4p = jnp.pad(wf4, ((0, 64), (0, PADDED_CLASSES - NUM_CLASSES)))  # (128,128)
    bf4p = jnp.concatenate(
        [bf4, jnp.full((1, PADDED_CLASSES - NUM_CLASSES), NEG_INF, jnp.float32)],
        axis=1)                                              # (1, 128)

    # Coalesce all biases into one (8, 256) f32 blob -> a single DMA.
    bias = jnp.zeros((8, 256), jnp.float32)
    bias = bias.at[0, :128].set(b1p[0])
    bias = bias.at[1, :128].set(b2f[0])
    bias = bias.at[2, :].set(b3f[0])
    bias = bias.at[3, :].set(bf1f[0])
    bias = bias.at[4, :128].set(bf2[0])
    bias = bias.at[5, :128].set(bf3p[0])
    bias = bias.at[6, :128].set(bf4p[0])

    weights = tuple(w.astype(dtype)
                    for w in (w1p, w2p, w3f, wf1f, wf2, wf3p, wf4p))
    return weights + (bias,)


# --------------------------------------------------------------------------
# Wrapper
# --------------------------------------------------------------------------
def _choose_batch_tile(batch, batch_tile):
    """16-sublane-aligned tile; guarantees >=2 grid steps when the batch is
    big enough so v7x's second TensorCore is never idle."""
    pb = _round_up(batch, 16)
    bt = min(_round_up(batch_tile, 16), pb)
    if bt >= pb and pb >= 32:          # whole batch fits one tile: split it
        bt = _round_up((pb + 1) // 2, 16)
    return bt


def custom_cnn_forward(x_ncw, kernel_params, *, batch_tile=4096, out_dtype=None):
    """x_ncw: (B, 128, 1) or (B, 128) float. Returns (B, 9) log-probs."""
    compute_dtype = kernel_params[0].dtype           # bf16 default, f32 optional
    if out_dtype is None:
        out_dtype = compute_dtype

    B = x_ncw.shape[0]
    if x_ncw.ndim == 3:
        assert x_ncw.shape[1] == IN_CH and x_ncw.shape[2] == SEQ_LEN
        x = x_ncw.reshape(B, IN_CH)                  # L == 1 squeeze
    else:
        assert x_ncw.shape[1] == IN_CH
        x = x_ncw
    # reshape + cast fuse under jit; allow_input_fusion below lets XLA fold
    # this producer into the Pallas input stream (no extra materialized copy).
    x = x.astype(compute_dtype)

    bt = _choose_batch_tile(B, batch_tile)
    padded_b = _round_up(B, bt)
    if padded_b != B:
        x = jnp.pad(x, ((0, padded_b - B), (0, 0)))
    grid = (padded_b // bt,)

    # Weights/bias: constant block index -> stay VMEM-resident across the
    # batch grid (no per-step re-DMA).  Only x/out stream from/to HBM.
    param_specs = [pl.BlockSpec(p.shape, lambda i: (0, 0)) for p in kernel_params]
    in_specs = [pl.BlockSpec((bt, IN_CH), lambda i: (i, 0))] + param_specs
    out_specs = pl.BlockSpec((bt, PADDED_CLASSES), lambda i: (i, 0))

    out = pl.pallas_call(
        cnn_kernel,
        grid=grid,
        in_specs=in_specs,
        out_specs=out_specs,
        out_shape=jax.ShapeDtypeStruct((padded_b, PADDED_CLASSES), out_dtype),
        compiler_params=pltpu.CompilerParams(
            dimension_semantics=("parallel",),               # shard batch on v7x
            allow_input_fusion=[True] + [False] * len(kernel_params),
            vmem_limit_bytes=48 * 1024 * 1024,               # fits v7x 64 MiB
        ),
    )(x, *kernel_params)

    return out[:B, :NUM_CLASSES]


# --------------------------------------------------------------------------
# Reference (original, unfolded semantics: conv -> relu -> BN per block)
# --------------------------------------------------------------------------
def reference_forward(x_ncw, raw):
    (w1, b1, w2, b2, w3, b3, wf1, bf1, wf2, bf2, wf3, bf3, wf4, bf4,
     s1, t1, s2, t2, s3, t3) = raw
    h = x_ncw[:, :, 0]
    h = jnp.maximum(h @ w1 + b1, 0.0) * s1 + t1
    h = jnp.maximum(h @ w2 + b2, 0.0) * s2 + t2
    h = jnp.maximum(h @ w3 + b3, 0.0) * s3 + t3
    h = jnp.maximum(h @ wf1 + bf1, 0.0)
    h = jnp.maximum(h @ wf2 + bf2, 0.0)
    h = jnp.maximum(h @ wf3 + bf3, 0.0)
    logits = h @ wf4 + bf4
    return jax.nn.log_softmax(logits, axis=1)


if __name__ == "__main__":
    key = jax.random.PRNGKey(0)
    kx, kp = jax.random.split(key)

    B = 8
    x = jax.random.normal(kx, (B, IN_CH, SEQ_LEN), dtype=jnp.float32)  # NCW
    raw = init_raw_params(kp)
    ref = reference_forward(x, raw)

    # Default fast path: bf16 weights / activations / x / out (f32 accumulate,
    # f32 bias+ReLU, f32 log_softmax).  Recommended on v5e, v6e and v7x.
    params_bf16 = pack_kernel_params(raw)                       # bf16
    fwd_bf16 = jax.jit(lambda xx: custom_cnn_forward(xx, params_bf16))
    out_bf16 = jax.block_until_ready(fwd_bf16(x))
    assert out_bf16.shape == (B, NUM_CLASSES)
    assert jnp.allclose(out_bf16.astype(jnp.float32), ref, atol=5e-2, rtol=5e-2)

    # f32 validation path (checks BN fold / lane padding / log_softmax exactly).
    params_f32 = pack_kernel_params(raw, jnp.float32)
    fwd_f32 = jax.jit(lambda xx: custom_cnn_forward(xx, params_f32))
    out_f32 = jax.block_until_ready(fwd_f32(x))
    assert out_f32.shape == (B, NUM_CLASSES)
    assert jnp.allclose(out_f32, ref, atol=1e-4, rtol=1e-4)

    print("KERNEL_OK")
</pallas_src>

<mosaic_0001>
module attributes {stable_mosaic.version = 11 : i64} {
  func.func @cnn_kernel(%arg0: i32, %arg1: memref<16x128xbf16, #tpu.memory_space<vmem>>, %arg2: memref<128x128xbf16, #tpu.memory_space<vmem>>, %arg3: memref<128x128xbf16, #tpu.memory_space<vmem>>, %arg4: memref<128x256xbf16, #tpu.memory_space<vmem>>, %arg5: memref<256x256xbf16, #tpu.memory_space<vmem>>, %arg6: memref<256x128xbf16, #tpu.memory_space<vmem>>, %arg7: memref<128x128xbf16, #tpu.memory_space<vmem>>, %arg8: memref<128x128xbf16, #tpu.memory_space<vmem>>, %arg9: memref<8x256xf32, #tpu.memory_space<vmem>>, %arg10: memref<16x128xbf16, #tpu.memory_space<vmem>>) attributes {dimension_semantics = [#tpu.dimension_semantics<parallel>], iteration_bounds = array<i64: 1>, scalar_prefetch = 0 : i64, scratch_operands = 0 : i64, tpu.core_type = #tpu.core_type<tc>, window_params = [{transform_indices = @transform_0, window_bounds = array<i64: 16, 128>}, {pipeline_mode = #tpu.pipeline_mode<synchronous>, transform_indices = @transform_1, window_bounds = array<i64: 128, 128>}, {pipeline_mode = #tpu.pipeline_mode<synchronous>, transform_indices = @transform_2, window_bounds = array<i64: 128, 128>}, {pipeline_mode = #tpu.pipeline_mode<synchronous>, transform_indices = @transform_3, window_bounds = array<i64: 128, 256>}, {pipeline_mode = #tpu.pipeline_mode<synchronous>, transform_indices = @transform_4, window_bounds = array<i64: 256, 256>}, {pipeline_mode = #tpu.pipeline_mode<synchronous>, transform_indices = @transform_5, window_bounds = array<i64: 256, 128>}, {pipeline_mode = #tpu.pipeline_mode<synchronous>, transform_indices = @transform_6, window_bounds = array<i64: 128, 128>}, {pipeline_mode = #tpu.pipeline_mode<synchronous>, transform_indices = @transform_7, window_bounds = array<i64: 128, 128>}, {pipeline_mode = #tpu.pipeline_mode<synchronous>, transform_indices = @transform_8, window_bounds = array<i64: 8, 256>}, {transform_indices = @transform_9, window_bounds = array<i64: 16, 128>}]} {
    %c0 = arith.constant 0 : index
    %c0_0 = arith.constant 0 : index
    %0 = vector.load %arg9[%c0, %c0_0] : memref<8x256xf32, #tpu.memory_space<vmem>>, vector<1x128xf32>
    %c1 = arith.constant 1 : index
    %c0_1 = arith.constant 0 : index
    %1 = vector.load %arg9[%c1, %c0_1] : memref<8x256xf32, #tpu.memory_space<vmem>>, vector<1x128xf32>
    %c2 = arith.constant 2 : index
    %c0_2 = arith.constant 0 : index
    %2 = vector.load %arg9[%c2, %c0_2] : memref<8x256xf32, #tpu.memory_space<vmem>>, vector<1x256xf32>
    %c3 = arith.constant 3 : index
    %c0_3 = arith.constant 0 : index
    %3 = vector.load %arg9[%c3, %c0_3] : memref<8x256xf32, #tpu.memory_space<vmem>>, vector<1x256xf32>
    %c4 = arith.constant 4 : index
    %c0_4 = arith.constant 0 : index
    %4 = vector.load %arg9[%c4, %c0_4] : memref<8x256xf32, #tpu.memory_space<vmem>>, vector<1x128xf32>
    %c5 = arith.constant 5 : index
    %c0_5 = arith.constant 0 : index
    %5 = vector.load %arg9[%c5, %c0_5] : memref<8x256xf32, #tpu.memory_space<vmem>>, vector<1x128xf32>
    %c6 = arith.constant 6 : index
    %c0_6 = arith.constant 0 : index
    %6 = vector.load %arg9[%c6, %c0_6] : memref<8x256xf32, #tpu.memory_space<vmem>>, vector<1x128xf32>
    %c0_7 = arith.constant 0 : index
    %c0_8 = arith.constant 0 : index
    %7 = vector.load %arg1[%c0_7, %c0_8] : memref<16x128xbf16, #tpu.memory_space<vmem>>, vector<16x128xbf16>
    %c0_9 = arith.constant 0 : index
    %c0_10 = arith.constant 0 : index
    %8 = vector.load %arg2[%c0_9, %c0_10] : memref<128x128xbf16, #tpu.memory_space<vmem>>, vector<128x128xbf16>
    %cst = arith.constant dense<0.000000e+00> : vector<16x128xf32>
    %9 = tpu.matmul %7, %8, %cst {dimension_numbers = #tpu.dot_dimension_numbers<[1], [0], [0], [1], [0, 0, 1, 1], [], []>} : vector<16x128xbf16>, vector<128x128xbf16>, vector<16x128xf32> -> vector<16x128xf32>
    %10 = vector.broadcast %0 : vector<1x128xf32> to vector<16x128xf32>
    %11 = arith.addf %9, %10 : vector<16x128xf32>
    %cst_11 = arith.constant 0.000000e+00 : f32
    %12 = vector.broadcast %cst_11 : f32 to vector<16x128xf32>
    %13 = arith.maximumf %11, %12 : vector<16x128xf32>
    %c0_12 = arith.constant 0 : index
    %c0_13 = arith.constant 0 : index
    %14 = vector.load %arg3[%c0_12, %c0_13] : memref<128x128xbf16, #tpu.memory_space<vmem>>, vector<128x128xbf16>
    %15 = arith.truncf %13 : vector<16x128xf32> to vector<16x128xbf16>
    %cst_14 = arith.constant dense<0.000000e+00> : vector<16x128xf32>
    %16 = tpu.matmul %15, %14, %cst_14 {dimension_numbers = #tpu.dot_dimension_numbers<[1], [0], [0], [1], [0, 0, 1, 1], [], []>} : vector<16x128xbf16>, vector<128x128xbf16>, vector<16x128xf32> -> vector<16x128xf32>
    %17 = vector.broadcast %1 : vector<1x128xf32> to vector<16x128xf32>
    %18 = arith.addf %16, %17 : vector<16x128xf32>
    %cst_15 = arith.constant 0.000000e+00 : f32
    %19 = vector.broadcast %cst_15 : f32 to vector<16x128xf32>
    %20 = arith.maximumf %18, %19 : vector<16x128xf32>
    %c0_16 = arith.constant 0 : index
    %c0_17 = arith.constant 0 : index
    %21 = vector.load %arg4[%c0_16, %c0_17] : memref<128x256xbf16, #tpu.memory_space<vmem>>, vector<128x256xbf16>
    %22 = arith.truncf %20 : vector<16x128xf32> to vector<16x128xbf16>
    %cst_18 = arith.constant dense<0.000000e+00> : vector<16x256xf32>
    %23 = tpu.matmul %22, %21, %cst_18 {dimension_numbers = #tpu.dot_dimension_numbers<[1], [0], [0], [1], [0, 0, 1, 1], [], []>} : vector<16x128xbf16>, vector<128x256xbf16>, vector<16x256xf32> -> vector<16x256xf32>
    %24 = vector.broadcast %2 : vector<1x256xf32> to vector<16x256xf32>
    %25 = arith.addf %23, %24 : vector<16x256xf32>
    %cst_19 = arith.constant 0.000000e+00 : f32
    %26 = vector.broadcast %cst_19 : f32 to vector<16x256xf32>
    %27 = arith.maximumf %25, %26 : vector<16x256xf32>
    %c0_20 = arith.constant 0 : index
    %c0_21 = arith.constant 0 : index
    %28 = vector.load %arg5[%c0_20, %c0_21] : memref<256x256xbf16, #tpu.memory_space<vmem>>, vector<256x256xbf16>
    %29 = arith.truncf %27 : vector<16x256xf32> to vector<16x256xbf16>
    %cst_22 = arith.constant dense<0.000000e+00> : vector<16x256xf32>
    %30 = tpu.matmul %29, %28, %cst_22 {dimension_numbers = #tpu.dot_dimension_numbers<[1], [0], [0], [1], [0, 0, 1, 1], [], []>} : vector<16x256xbf16>, vector<256x256xbf16>, vector<16x256xf32> -> vector<16x256xf32>
    %31 = vector.broadcast %3 : vector<1x256xf32> to vector<16x256xf32>
    %32 = arith.addf %30, %31 : vector<16x256xf32>
    %cst_23 = arith.constant 0.000000e+00 : f32
    %33 = vector.broadcast %cst_23 : f32 to vector<16x256xf32>
    %34 = arith.maximumf %32, %33 : vector<16x256xf32>
    %c0_24 = arith.constant 0 : index
    %c0_25 = arith.constant 0 : index
    %35 = vector.load %arg6[%c0_24, %c0_25] : memref<256x128xbf16, #tpu.memory_space<vmem>>, vector<256x128xbf16>
    %36 = arith.truncf %34 : vector<16x256xf32> to vector<16x256xbf16>
    %cst_26 = arith.constant dense<0.000000e+00> : vector<16x128xf32>
    %37 = tpu.matmul %36, %35, %cst_26 {dimension_numbers = #tpu.dot_dimension_numbers<[1], [0], [0], [1], [0, 0, 1, 1], [], []>} : vector<16x256xbf16>, vector<256x128xbf16>, vector<16x128xf32> -> vector<16x128xf32>
    %38 = vector.broadcast %4 : vector<1x128xf32> to vector<16x128xf32>
    %39 = arith.addf %37, %38 : vector<16x128xf32>
    %cst_27 = arith.constant 0.000000e+00 : f32
    %40 = vector.broadcast %cst_27 : f32 to vector<16x128xf32>
    %41 = arith.maximumf %39, %40 : vector<16x128xf32>
    %c0_28 = arith.constant 0 : index
    %c0_29 = arith.constant 0 : index
    %42 = vector.load %arg7[%c0_28, %c0_29] : memref<128x128xbf16, #tpu.memory_space<vmem>>, vector<128x128xbf16>
    %43 = arith.truncf %41 : vector<16x128xf32> to vector<16x128xbf16>
    %cst_30 = arith.constant dense<0.000000e+00> : vector<16x128xf32>
    %44 = tpu.matmul %43, %42, %cst_30 {dimension_numbers = #tpu.dot_dimension_numbers<[1], [0], [0], [1], [0, 0, 1, 1], [], []>} : vector<16x128xbf16>, vector<128x128xbf16>, vector<16x128xf32> -> vector<16x128xf32>
    %45 = vector.broadcast %5 : vector<1x128xf32> to vector<16x128xf32>
    %46 = arith.addf %44, %45 : vector<16x128xf32>
    %cst_31 = arith.constant 0.000000e+00 : f32
    %47 = vector.broadcast %cst_31 : f32 to vector<16x128xf32>
    %48 = arith.maximumf %46, %47 : vector<16x128xf32>
    %c0_32 = arith.constant 0 : index
    %c0_33 = arith.constant 0 : index
    %49 = vector.load %arg8[%c0_32, %c0_33] : memref<128x128xbf16, #tpu.memory_space<vmem>>, vector<128x128xbf16>
    %50 = arith.truncf %48 : vector<16x128xf32> to vector<16x128xbf16>
    %cst_34 = arith.constant dense<0.000000e+00> : vector<16x128xf32>
    %51 = tpu.matmul %50, %49, %cst_34 {dimension_numbers = #tpu.dot_dimension_numbers<[1], [0], [0], [1], [0, 0, 1, 1], [], []>} : vector<16x128xbf16>, vector<128x128xbf16>, vector<16x128xf32> -> vector<16x128xf32>
    %52 = vector.broadcast %6 : vector<1x128xf32> to vector<16x128xf32>
    %53 = arith.addf %51, %52 : vector<16x128xf32>
    %cst_35 = arith.constant dense<0xFF800000> : vector<16xf32>
    %54 = vector.multi_reduction <maximumf>, %53, %cst_35 [1] : vector<16x128xf32> to vector<16xf32>
    %55 = vector.shape_cast %54 : vector<16xf32> to vector<16x1xf32>
    %56 = vector.broadcast %55 : vector<16x1xf32> to vector<16x128xf32>
    %57 = arith.subf %53, %56 : vector<16x128xf32>
    %58 = math.exp %57 : vector<16x128xf32>
    %cst_36 = arith.constant dense<0.000000e+00> : vector<16xf32>
    %59 = vector.multi_reduction <add>, %58, %cst_36 [1] : vector<16x128xf32> to vector<16xf32>
    %60 = vector.shape_cast %59 : vector<16xf32> to vector<16x1xf32>
    %61 = math.log %60 : vector<16x1xf32>
    %62 = vector.broadcast %61 : vector<16x1xf32> to vector<16x128xf32>
    %63 = arith.subf %57, %62 : vector<16x128xf32>
    %64 = arith.truncf %63 : vector<16x128xf32> to vector<16x128xbf16>
    %c0_37 = arith.constant 0 : index
    %c0_38 = arith.constant 0 : index
    %65 = vector.load %arg10[%c0_37, %c0_38] : memref<16x128xbf16, #tpu.memory_space<vmem>>, vector<16x128xbf16>
    tpu.vector_store %arg10[%c0_37, %c0_38], %64 {strides = array<i32>} : memref<16x128xbf16, #tpu.memory_space<vmem>>, vector<16x128xbf16>,
    return
  }
  func.func @transform_0(%arg0: i32) -> (i32, i32) {
    %c0_i32 = arith.constant 0 : i32
    %c0_i32_0 = arith.constant 0 : i32
    return %arg0, %c0_i32 : i32, i32
  }
  func.func @transform_1(%arg0: i32) -> (i32, i32) {
    %c0_i32 = arith.constant 0 : i32
    %c0_i32_0 = arith.constant 0 : i32
    %c0_i32_1 = arith.constant 0 : i32
    return %c0_i32, %c0_i32_0 : i32, i32
  }
  func.func @transform_2(%arg0: i32) -> (i32, i32) {
    %c0_i32 = arith.constant 0 : i32
    %c0_i32_0 = arith.constant 0 : i32
    %c0_i32_1 = arith.constant 0 : i32
    return %c0_i32, %c0_i32_0 : i32, i32
  }
  func.func @transform_3(%arg0: i32) -> (i32, i32) {
    %c0_i32 = arith.constant 0 : i32
    %c0_i32_0 = arith.constant 0 : i32
    %c0_i32_1 = arith.constant 0 : i32
    return %c0_i32, %c0_i32_0 : i32, i32
  }
  func.func @transform_4(%arg0: i32) -> (i32, i32) {
    %c0_i32 = arith.constant 0 : i32
    %c0_i32_0 = arith.constant 0 : i32
    %c0_i32_1 = arith.constant 0 : i32
    return %c0_i32, %c0_i32_0 : i32, i32
  }
  func.func @transform_5(%arg0: i32) -> (i32, i32) {
    %c0_i32 = arith.constant 0 : i32
    %c0_i32_0 = arith.constant 0 : i32
    %c0_i32_1 = arith.constant 0 : i32
    return %c0_i32, %c0_i32_0 : i32, i32
  }
  func.func @transform_6(%arg0: i32) -> (i32, i32) {
    %c0_i32 = arith.constant 0 : i32
    %c0_i32_0 = arith.constant 0 : i32
    %c0_i32_1 = arith.constant 0 : i32
    return %c0_i32, %c0_i32_0 : i32, i32
  }
  func.func @transform_7(%arg0: i32) -> (i32, i32) {
    %c0_i32 = arith.constant 0 : i32
    %c0_i32_0 = arith.constant 0 : i32
    %c0_i32_1 = arith.constant 0 : i32
    return %c0_i32, %c0_i32_0 : i32, i32
  }
  func.func @transform_8(%arg0: i32) -> (i32, i32) {
    %c0_i32 = arith.constant 0 : i32
    %c0_i32_0 = arith.constant 0 : i32
    %c0_i32_1 = arith.constant 0 : i32
    return %c0_i32, %c0_i32_0 : i32, i32
  }
  func.func @transform_9(%arg0: i32) -> (i32, i32) {
    %c0_i32 = arith.constant 0 : i32
    %c0_i32_0 = arith.constant 0 : i32
    return %arg0, %c0_i32 : i32, i32
  }
}

</mosaic_0001>

<llo_original>
// kernel: _lambda_.2
$region0: #{_lambda_.2}
  #allocation0 [shape = 'u32[]', space=smem, size = 0x4, offset = 0x4, fixed_abs, tag = 'smem constant byte address 0x4 - core index']
  #allocation1 [shape = 'u32[144,128]{1,0:T(1,128)}', space=vmem, size = 0x12000, scoped, tag = 'internal scratch']
  #allocation2 [shape = 'u32[2048]{0}', space=vmem, size = 0x2000, scoped, tag = 'scoped memory for _lambda_.2']
  #allocation3 [shape = 'u32[2048]{0}', space=vmem, size = 0x2000, scoped, tag = 'scoped memory for _lambda_.2']
  #allocation4 [shape = 'u32[2048]{0}', space=vmem, size = 0x2000, scoped, tag = 'scoped memory for _lambda_.2']
  #allocation5 [shape = 'u32[2048]{0}', space=vmem, size = 0x2000, scoped, tag = 'scoped memory for _lambda_.2']
  #allocation6 [shape = 'u32[2048]{0}', space=vmem, size = 0x2000, scoped, tag = 'scoped memory for _lambda_.2']
  %s0 = inlined_call_operand.hbm [shape: bf16[128,128], index: 0, kind: input, shape index: {}]
  %s1 = inlined_call_operand.hbm [shape: bf16[128,128], index: 1, kind: input, shape index: {}]
  %s2 = inlined_call_operand.hbm [shape: bf16[128,256], index: 2, kind: input, shape index: {}]
  %s3 = inlined_call_operand.hbm [shape: bf16[256,256], index: 3, kind: input, shape index: {}]
  %s4 = inlined_call_operand.hbm [shape: bf16[256,128], index: 4, kind: input, shape index: {}]
  %s5 = inlined_call_operand.hbm [shape: bf16[128,128], index: 5, kind: input, shape index: {}]
  %s6 = inlined_call_operand.hbm [shape: bf16[128,128], index: 6, kind: input, shape index: {}]
  %s7 = inlined_call_operand.vmem [shape: f32[8,256], index: 7, kind: input, shape index: {}]
  %s8 = inlined_call_operand.vmem [shape: bf16[8,128], index: 8, kind: input, shape index: {}]
  %s9 = inlined_call_operand.<no memory space> [shape: bf16[], index: 9, kind: input, shape index: {}]
  %s10 = inlined_call_operand.vmem [shape: bf16[16,128], index: 10, kind: output, shape index: {}]
  %s11 = sld [smem:[#allocation0]]
  $region74: #{_lambda_.2} parent=0
    _
  %s13 = ssub.s32 1, %s11
  %s14 = scalar_select 0, %s13, %s11
  %v15 = vstv %s9
  %v16 = vunpack.i.l.bf16 %v15
  %v18 = vunpack.i.h.bf16 %v15
  $region1: #{_lambda_.2} parent=0
    #allocation7 [shape = 'u8[32768]{0}', space=vmem, size = 0x8000, scoped, tag = 'input window, operand 1, single buffered']
    #allocation8 [shape = 's32[1]{0}', space=sflag, size = 0x4, scoped, tag = 'scoped memory for _lambda_.2']
    #allocation9 [shape = 'u8[32768]{0}', space=vmem, size = 0x8000, scoped, tag = 'input window, operand 2, single buffered']
    #allocation10 [shape = 's32[1]{0}', space=sflag, size = 0x4, scoped, tag = 'scoped memory for _lambda_.2']
    #allocation11 [shape = 'u8[65536]{0}', space=vmem, size = 0x10000, scoped, tag = 'input window, operand 3, single buffered']
    #allocation12 [shape = 'u8[131072]{0}', space=vmem, size = 0x20000, scoped, tag = 'input window, operand 4, single buffered']
    #allocation13 [shape = 's32[1]{0}', space=sflag, size = 0x4, scoped, tag = 'scoped memory for _lambda_.2']
    #allocation14 [shape = 'u8[65536]{0}', space=vmem, size = 0x10000, scoped, tag = 'input window, operand 5, single buffered']
    #allocation15 [shape = 'u8[32768]{0}', space=vmem, size = 0x8000, scoped, tag = 'input window, operand 6, single buffered']
    #allocation16 [shape = 's32[1]{0}', space=sflag, size = 0x4, scoped, tag = 'scoped memory for _lambda_.2']
    #allocation17 [shape = 'u8[32768]{0}', space=vmem, size = 0x8000, scoped, tag = 'input window, operand 7, single buffered']
    #allocation18 [shape = 'u8[4096]{0}', space=vmem, size = 0x1000, dematerialized = true, scoped, tag = 'FusionAdapter Buffer %fusion.1 = bf16[16,128]{1,0:T(8,128)(2,1)} fusion(%param_8.1, %param_9), kind=kLoop, calls=%fused_computation.1.clone, metadata={op_name="jit(<lambda>)/jit(_pad)/pad" stack_frame_id=11}']
    %20 = vsyncpa [#allocation8], 0
    %21 = vsyncpa [#allocation10], 0
    %22 = vsyncpa [#allocation13], 0
    %23 = vsyncpa [#allocation16], 0
    // Predicated region
    $region2: #{_lambda_.2} parent=1 // pred_check
      _
    $region3: #{_lambda_.2} parent=1 // pred_check_branch
      %25 = sbr.rel (0) target = $region5
    $region4: #{_lambda_.2} parent=1 // pred_region
      _
    $region5: #{_lambda_.2} parent=1 // pred_fallthru
      _
    // Predicated region
    $region6: #{_lambda_.2} parent=1 // pred_check
      _
    $region7: #{_lambda_.2} parent=1 // pred_check_branch
      %27 = sbr.rel (0) target = $region9
    $region8: #{_lambda_.2} parent=1 // pred_region
      %s29 = ssub.s32 1024, 1024
      %30 = vsyncadd [#allocation8], %s29
      %s31 = sshll.u32 [#allocation7], 4
      %s32 = int_to_ptr.vmem [resolvable:$true] %s31
      %37 = dma.hbm_to_vmem [thread:$0]  %s0, 1024, %s32, [#allocation8], 128, 128, 8
    $region9: #{_lambda_.2} parent=1 // pred_fallthru
      _
    // Predicated region
    $region10: #{_lambda_.2} parent=1 // pred_check
      _
    $region11: #{_lambda_.2} parent=1 // pred_check_branch
      %39 = sbr.rel (0) target = $region13
    $region12: #{_lambda_.2} parent=1 // pred_region
      %s41 = ssub.s32 1024, 1024
      %42 = vsyncadd [#allocation10], %s41
      %s43 = sshll.u32 [#allocation9], 4
      %s44 = int_to_ptr.vmem [resolvable:$true] %s43
      %49 = dma.hbm_to_vmem [thread:$0]  %s1, 1024, %s44, [#allocation10], 128, 128, 8
    $region13: #{_lambda_.2} parent=1 // pred_fallthru
      _
    // Predicated region
    $region14: #{_lambda_.2} parent=1 // pred_check
      _
    $region15: #{_lambda_.2} parent=1 // pred_check_branch
      %51 = sbr.rel (0) target = $region17
    $region16: #{_lambda_.2} parent=1 // pred_region
      %s53 = ssub.s32 2048, 2048
      %54 = vsyncadd [#allocation10], %s53
      %s55 = sshll.u32 [#allocation11], 4
      %s56 = int_to_ptr.vmem [resolvable:$true] %s55
      %61 = dma.hbm_to_vmem [thread:$0]  %s2, 2048, %s56, [#allocation10], 256, 256, 16
    $region17: #{_lambda_.2} parent=1 // pred_fallthru
      _
    // Predicated region
    $region18: #{_lambda_.2} parent=1 // pred_check
      _
    $region19: #{_lambda_.2} parent=1 // pred_check_branch
      %63 = sbr.rel (0) target = $region21
    $region20: #{_lambda_.2} parent=1 // pred_region
      %s65 = ssub.s32 4096, 4096
      %66 = vsyncadd [#allocation13], %s65
      %s67 = sshll.u32 [#allocation12], 4
      %s68 = int_to_ptr.vmem [resolvable:$true] %s67
      %73 = dma.hbm_to_vmem [thread:$0]  %s3, 4096, %s68, [#allocation13], 256, 256, 16
    $region21: #{_lambda_.2} parent=1 // pred_fallthru
      _
    // Predicated region
    $region22: #{_lambda_.2} parent=1 // pred_check
      _
    $region23: #{_lambda_.2} parent=1 // pred_check_branch
      %75 = sbr.rel (0) target = $region25
    $region24: #{_lambda_.2} parent=1 // pred_region
      %s77 = ssub.s32 2048, 2048
      %78 = vsyncadd [#allocation13], %s77
      %s79 = sshll.u32 [#allocation14], 4
      %s80 = int_to_ptr.vmem [resolvable:$true] %s79
      %85 = dma.hbm_to_vmem [thread:$0]  %s4, 2048, %s80, [#allocation13], 128, 128, 8
    $region25: #{_lambda_.2} parent=1 // pred_fallthru
      _
    // Predicated region
    $region26: #{_lambda_.2} parent=1 // pred_check
      _
    $region27: #{_lambda_.2} parent=1 // pred_check_branch
      %87 = sbr.rel (0) target = $region29
    $region28: #{_lambda_.2} parent=1 // pred_region
      %s89 = ssub.s32 1024, 1024
      %90 = vsyncadd [#allocation16], %s89
      %s91 = sshll.u32 [#allocation15], 4
      %s92 = int_to_ptr.vmem [resolvable:$true] %s91
      %97 = dma.hbm_to_vmem [thread:$0]  %s5, 1024, %s92, [#allocation16], 128, 128, 8
    $region29: #{_lambda_.2} parent=1 // pred_fallthru
      _
    // Predicated region
    $region30: #{_lambda_.2} parent=1 // pred_check
      _
    $region31: #{_lambda_.2} parent=1 // pred_check_branch
      %99 = sbr.rel (0) target = $region33
    $region32: #{_lambda_.2} parent=1 // pred_region
      %s101 = ssub.s32 1024, 1024
      %102 = vsyncadd [#allocation16], %s101
      %s103 = sshll.u32 [#allocation17], 4
      %s104 = int_to_ptr.vmem [resolvable:$true] %s103
      %109 = dma.hbm_to_vmem [thread:$0]  %s6, 1024, %s104, [#allocation16], 128, 128, 8
    $region33: #{_lambda_.2} parent=1 // pred_fallthru
      _
    // Predicated region
    $region34: #{_lambda_.2} parent=1 // pred_check
      _
    $region35: #{_lambda_.2} parent=1 // pred_check_branch
      %111 = sbr.rel (0) target = $region37
    $region36: #{_lambda_.2} parent=1 // pred_region
      _
    $region37: #{_lambda_.2} parent=1 // pred_fallthru
      _
    // Predicated region
    $region38: #{_lambda_.2} parent=1 // pred_check
      _
    $region39: #{_lambda_.2} parent=1 // pred_check_branch
      %113 = sbr.rel (0) target = $region41
    $region40: #{_lambda_.2} parent=1 // pred_region
      %114 = dma.done [#allocation8], 1024
    $region41: #{_lambda_.2} parent=1 // pred_fallthru
      _
    // Predicated region
    $region42: #{_lambda_.2} parent=1 // pred_check
      _
    $region43: #{_lambda_.2} parent=1 // pred_check_branch
      %116 = sbr.rel (0) target = $region45
    $region44: #{_lambda_.2} parent=1 // pred_region
      %117 = dma.done [#allocation10], 1024
    $region45: #{_lambda_.2} parent=1 // pred_fallthru
      _
    // Predicated region
    $region46: #{_lambda_.2} parent=1 // pred_check
      _
    $region47: #{_lambda_.2} parent=1 // pred_check_branch
      %119 = sbr.rel (0) target = $region49
    $region48: #{_lambda_.2} parent=1 // pred_region
      %120 = dma.done [#allocation10], 2048
    $region49: #{_lambda_.2} parent=1 // pred_fallthru
      _
    // Predicated region
    $region50: #{_lambda_.2} parent=1 // pred_check
      _
    $region51: #{_lambda_.2} parent=1 // pred_check_branch
      %122 = sbr.rel (0) target = $region53
    $region52: #{_lambda_.2} parent=1 // pred_region
      %123 = dma.done [#allocation13], 4096
    $region53: #{_lambda_.2} parent=1 // pred_fallthru
      _
    // Predicated region
    $region54: #{_lambda_.2} parent=1 // pred_check
      _
    $region55: #{_lambda_.2} parent=1 // pred_check_branch
      %125 = sbr.rel (0) target = $region57
    $region56: #{_lambda_.2} parent=1 // pred_region
      %126 = dma.done [#allocation13], 2048
    $region57: #{_lambda_.2} parent=1 // pred_fallthru
      _
    // Predicated region
    $region58: #{_lambda_.2} parent=1 // pred_check
      _
    $region59: #{_lambda_.2} parent=1 // pred_check_branch
      %128 = sbr.rel (0) target = $region61
    $region60: #{_lambda_.2} parent=1 // pred_region
      %129 = dma.done [#allocation16], 1024
    $region61: #{_lambda_.2} parent=1 // pred_fallthru
      _
    // Predicated region
    $region62: #{_lambda_.2} parent=1 // pred_check
      _
    $region63: #{_lambda_.2} parent=1 // pred_check_branch
      %131 = sbr.rel (0) target = $region65
    $region64: #{_lambda_.2} parent=1 // pred_region
      %132 = dma.done [#allocation16], 1024
    $region65: #{_lambda_.2} parent=1 // pred_fallthru
      _
    %s134 = sor.u32 255, 127
    %s135 = sand.u32 %s134, 85
    %s136 = sshrl.u32 %s135, 1
    %s137 = sor.u32 %s135, %s136
    %s138 = sand.u32 51, %s137
    %s139 = sshrl.u32 %s138, 2
    %s140 = sor.u32 %s138, %s139
    %s141 = sand.u32 15, %s140
    %v142 = vld [vmem:[%s8] sm:%s141]
    %v143 = vunpack.c.l.bf16 %v142
    %v144 = vunpack.c.h.bf16 %v142
    %v145 = vpack.c.bf16 0.0, %v143
    %147 = vst [vmem:[#allocation18] sm:$0xf] %v145
    %s148 = scalar_lea.vmem [#allocation18], 4
    %v149 = vpack.c.bf16 0.0, %v16
    %151 = vst [vmem:[%s148] sm:$0xf] %v149
    %v153 = vld [vmem:[%s7] ss:$0 sm:$0xff]
    %v154 = vld [vmem:[%s7 + $0x1] ss:$0 sm:$0xff]
    %s155 = scalar_lea.vmem %s7, 2
    %v156 = vld [vmem:[%s155] ss:$8 sm:$0x3]
    %s157 = scalar_lea.vmem %s7, 3
    %v158 = vld [vmem:[%s157] ss:$8 sm:$0x3]
    %v159 = vld [vmem:[%s7 + $0x4] ss:$0 sm:$0xff]
    %v160 = vld [vmem:[%s7 + $0x5] ss:$0 sm:$0xff]
    %v161 = vld [vmem:[%s7 + $0x6] ss:$0 sm:$0xff]
    %v162 = vld [vmem:[#allocation18] sm:$0xf]
    %v163 = vld [vmem:[#allocation18 + $0x4] sm:$0xf]
    %v164 = vld [vmem:[#allocation7] sm:$0xff]
    %v165 = vld [vmem:[#allocation7 + $0x8] sm:$0xff]
    %v166 = vld [vmem:[#allocation7 + $0x10] sm:$0xff]
    %v167 = vld [vmem:[#allocation7 + $0x18] sm:$0xff]
    %v168 = vld [vmem:[#allocation7 + $0x20] sm:$0xff]
    %v169 = vld [vmem:[#allocation7 + $0x28] sm:$0xff]
    %v170 = vld [vmem:[#allocation7 + $0x30] sm:$0xff]
    %v171 = vld [vmem:[#allocation7 + $0x38] sm:$0xff]
    %v174 = vunpack.c.l.b16 %v162
    %v175 = vunpack.c.l.b16 %v163
    %v176 = vpack.c.b16 %v175, %v174
    %178 = vmatprep.subr.bf16.mxu0 0
    %179 = vmatpush1.bf16.msra.mxu0 %v164
    %180 = vmatprep.subr.bf16.mxu0 0
    %181 = vmatpush1.bf16.msra.mxu0 %v165
    %182 = vmatprep.subr.bf16.mxu0 0
    %183 = vmatpush1.bf16.msra.mxu0 %v166
    %184 = vmatprep.subr.bf16.mxu0 0
    %185 = vmatpush1.bf16.msra.mxu0 %v167
    %186 = vmatprep.subr.bf16.mxu0 0
    %187 = vmatpush1.bf16.msra.mxu0 %v168
    %188 = vmatprep.subr.bf16.mxu0 0
    %189 = vmatpush1.bf16.msra.mxu0 %v169
    %190 = vmatprep.subr.bf16.mxu0 0
    %191 = vmatpush1.bf16.msra.mxu0 %v170
    %192 = vmatprep.subr.bf16.mxu0 0
    %193 = vmatpush1.bf16.msra.mxu0 %v171
    %194 = vmatprep.subr.bf16.mxu0 0
    %195 = vmatpush1.bf16.msra.mxu0 0
    %196 = vmatprep.subr.bf16.mxu0 0
    %197 = vmatpush1.bf16.msra.mxu0 0
    %198 = vmatprep.subr.bf16.mxu0 0
    %199 = vmatpush1.bf16.msra.mxu0 0
    %200 = vmatprep.subr.bf16.mxu0 0
    %201 = vmatpush1.bf16.msra.mxu0 0
    %202 = vmatprep.subr.bf16.mxu0 0
    %203 = vmatpush1.bf16.msra.mxu0 0
    %204 = vmatprep.subr.bf16.mxu0 0
    %205 = vmatpush1.bf16.msra.mxu0 0
    %206 = vmatprep.subr.bf16.mxu0 0
    %207 = vmatpush1.bf16.msra.mxu0 0
    %208 = vmatprep.subr.bf16.mxu0 0
    %209 = vmatpush1.bf16.msra.mxu0 0
    %210 = vmatprep.mubr.bf16.mxu0 0
    %211 = vmatmul.mubr.bf16.gmra.mrb[0].mxu0 %v176
    %v212 = vpop.f32.mrb[0].mxu0
    %v213 = vadd.f32 %v153, %v212
    %v214 = vpop.f32.mrb[0].mxu0
    %v215 = vpop.f32.mrb[0].mxu0
    %v216 = vadd.f32 %v153, %v215
    %v217 = vpop.f32.mrb[0].mxu0
    %218 = vdwg.mxu0
    %v219 = vmax.f32 %v213, 0.0
    %v220 = vmax.f32 %v216, 0.0
    %v221 = vld [vmem:[#allocation9] sm:$0xff]
    %v222 = vld [vmem:[#allocation9 + $0x8] sm:$0xff]
    %v223 = vld [vmem:[#allocation9 + $0x10] sm:$0xff]
    %v224 = vld [vmem:[#allocation9 + $0x18] sm:$0xff]
    %v225 = vld [vmem:[#allocation9 + $0x20] sm:$0xff]
    %v226 = vld [vmem:[#allocation9 + $0x28] sm:$0xff]
    %v227 = vld [vmem:[#allocation9 + $0x30] sm:$0xff]
    %v228 = vld [vmem:[#allocation9 + $0x38] sm:$0xff]
    %v229 = vpack.c.bf16 %v220, %v219
    %230 = vmatprep.subr.bf16.mxu0 0
    %231 = vmatpush1.bf16.msra.mxu0 %v221
    %232 = vmatprep.subr.bf16.mxu0 0
    %233 = vmatpush1.bf16.msra.mxu0 %v222
    %234 = vmatprep.subr.bf16.mxu0 0
    %235 = vmatpush1.bf16.msra.mxu0 %v223
    %236 = vmatprep.subr.bf16.mxu0 0
    %237 = vmatpush1.bf16.msra.mxu0 %v224
    %238 = vmatprep.subr.bf16.mxu0 0
    %239 = vmatpush1.bf16.msra.mxu0 %v225
    %240 = vmatprep.subr.bf16.mxu0 0
    %241 = vmatpush1.bf16.msra.mxu0 %v226
    %242 = vmatprep.subr.bf16.mxu0 0
    %243 = vmatpush1.bf16.msra.mxu0 %v227
    %244 = vmatprep.subr.bf16.mxu0 0
    %245 = vmatpush1.bf16.msra.mxu0 %v228
    %246 = vmatprep.subr.bf16.mxu0 0
    %247 = vmatpush1.bf16.msra.mxu0 0
    %248 = vmatprep.subr.bf16.mxu0 0
    %249 = vmatpush1.bf16.msra.mxu0 0
    %250 = vmatprep.subr.bf16.mxu0 0
    %251 = vmatpush1.bf16.msra.mxu0 0
    %252 = vmatprep.subr.bf16.mxu0 0
    %253 = vmatpush1.bf16.msra.mxu0 0
    %254 = vmatprep.subr.bf16.mxu0 0
    %255 = vmatpush1.bf16.msra.mxu0 0
    %256 = vmatprep.subr.bf16.mxu0 0
    %257 = vmatpush1.bf16.msra.mxu0 0
    %258 = vmatprep.subr.bf16.mxu0 0
    %259 = vmatpush1.bf16.msra.mxu0 0
    %260 = vmatprep.subr.bf16.mxu0 0
    %261 = vmatpush1.bf16.msra.mxu0 0
    %262 = vmatprep.mubr.bf16.mxu0 0
    %263 = vmatmul.mubr.bf16.gmra.mrb[0].mxu0 %v229
    %v264 = vpop.f32.mrb[0].mxu0
    %v265 = vadd.f32 %v154, %v264
    %v266 = vpop.f32.mrb[0].mxu0
    %v267 = vpop.f32.mrb[0].mxu0
    %v268 = vadd.f32 %v154, %v267
    %v269 = vpop.f32.mrb[0].mxu0
    %270 = vdwg.mxu0
    %v271 = vmax.f32 %v265, 0.0
    %v272 = vmax.f32 %v268, 0.0
    %v273 = vld [vmem:[#allocation11] sm:$0xff]
    %v274 = vld [vmem:[#allocation11 + $0x8] sm:$0xff]
    %v275 = vld [vmem:[#allocation11 + $0x10] sm:$0xff]
    %v276 = vld [vmem:[#allocation11 + $0x18] sm:$0xff]
    %v277 = vld [vmem:[#allocation11 + $0x20] sm:$0xff]
    %v278 = vld [vmem:[#allocation11 + $0x28] sm:$0xff]
    %v279 = vld [vmem:[#allocation11 + $0x30] sm:$0xff]
    %v280 = vld [vmem:[#allocation11 + $0x38] sm:$0xff]
    %v281 = vld [vmem:[#allocation11 + $0x40] sm:$0xff]
    %v282 = vld [vmem:[#allocation11 + $0x48] sm:$0xff]
    %v283 = vld [vmem:[#allocation11 + $0x50] sm:$0xff]
    %v284 = vld [vmem:[#allocation11 + $0x58] sm:$0xff]
    %v285 = vld [vmem:[#allocation11 + $0x60] sm:$0xff]
    %v286 = vld [vmem:[#allocation11 + $0x68] sm:$0xff]
    %v287 = vld [vmem:[#allocation11 + $0x70] sm:$0xff]
    %v288 = vld [vmem:[#allocation11 + $0x78] sm:$0xff]
    %v289 = vpack.c.bf16 %v272, %v271
    %v291 = vlaneseq
    %v292 = vshrl.u32 %v291, 7
    %v293 = vsub.s32 0, %v292
    %v294 = vrot.slane %v156, %v293
    %v295 = vlaneseq
    %v296 = vshrl.u32 %v295, 7
    %v297 = vsub.s32 1, %v296
    %v298 = vrot.slane %v156, %v297
    %301 = vmatprep.subr.bf16.mxu0 %v274
    %302 = vmatpush1.bf16.msra.mxu0 %v273
    %303 = vmatprep.subr.bf16.mxu0 %v276
    %304 = vmatpush1.bf16.msra.mxu0 %v275
    %305 = vmatprep.subr.bf16.mxu0 %v278
    %306 = vmatpush1.bf16.msra.mxu0 %v277
    %307 = vmatprep.subr.bf16.mxu0 %v280
    %308 = vmatpush1.bf16.msra.mxu0 %v279
    %309 = vmatprep.subr.bf16.mxu0 %v282
    %310 = vmatpush1.bf16.msra.mxu0 %v281
    %311 = vmatprep.subr.bf16.mxu0 %v284
    %312 = vmatpush1.bf16.msra.mxu0 %v283
    %313 = vmatprep.subr.bf16.mxu0 %v286
    %314 = vmatpush1.bf16.msra.mxu0 %v285
    %315 = vmatprep.subr.bf16.mxu0 %v288
    %316 = vmatpush1.bf16.msra.mxu0 %v287
    %317 = vmatprep.subr.bf16.mxu0 0
    %318 = vmatpush1.bf16.msra.mxu0 0
    %319 = vmatprep.subr.bf16.mxu0 0
    %320 = vmatpush1.bf16.msra.mxu0 0
    %321 = vmatprep.subr.bf16.mxu0 0
    %322 = vmatpush1.bf16.msra.mxu0 0
    %323 = vmatprep.subr.bf16.mxu0 0
    %324 = vmatpush1.bf16.msra.mxu0 0
    %325 = vmatprep.subr.bf16.mxu0 0
    %326 = vmatpush1.bf16.msra.mxu0 0
    %327 = vmatprep.subr.bf16.mxu0 0
    %328 = vmatpush1.bf16.msra.mxu0 0
    %329 = vmatprep.subr.bf16.mxu0 0
    %330 = vmatpush1.bf16.msra.mxu0 0
    %331 = vmatprep.subr.bf16.mxu0 0
    %332 = vmatpush1.bf16.msra.mxu0 0
    %333 = vmatprep.mubr.bf16.mxu0 0
    %334 = vmatmul.mubr.bf16.gmra.mrb[0].mxu0 %v289
    %v335 = vpop.f32.mrb[0].mxu0
    %v336 = vadd.f32 %v294, %v335
    %v337 = vpop.f32.mrb[0].mxu0
    %v338 = vadd.f32 %v298, %v337
    %v339 = vpop.f32.mrb[0].mxu0
    %v340 = vadd.f32 %v294, %v339
    %v341 = vpop.f32.mrb[0].mxu0
    %v342 = vadd.f32 %v298, %v341
    %343 = vdwg.mxu0
    %v344 = vmax.f32 %v336, 0.0
    %v345 = vmax.f32 %v338, 0.0
    %v346 = vmax.f32 %v340, 0.0
    %v347 = vmax.f32 %v342, 0.0
    %v348 = vld [vmem:[#allocation12] sm:$0xff]
    %v349 = vld [vmem:[#allocation12 + $0x8] sm:$0xff]
    %v350 = vld [vmem:[#allocation12 + $0x10] sm:$0xff]
    %v351 = vld [vmem:[#allocation12 + $0x18] sm:$0xff]
    %v352 = vld [vmem:[#allocation12 + $0x20] sm:$0xff]
    %v353 = vld [vmem:[#allocation12 + $0x28] sm:$0xff]
    %v354 = vld [vmem:[#allocation12 + $0x30] sm:$0xff]
    %v355 = vld [vmem:[#allocation12 + $0x38] sm:$0xff]
    %v356 = vld [vmem:[#allocation12 + $0x40] sm:$0xff]
    %v357 = vld [vmem:[#allocation12 + $0x48] sm:$0xff]
    %v358 = vld [vmem:[#allocation12 + $0x50] sm:$0xff]
    %v359 = vld [vmem:[#allocation12 + $0x58] sm:$0xff]
    %v360 = vld [vmem:[#allocation12 + $0x60] sm:$0xff]
    %v361 = vld [vmem:[#allocation12 + $0x68] sm:$0xff]
    %v362 = vld [vmem:[#allocation12 + $0x70] sm:$0xff]
    %v363 = vld [vmem:[#allocation12 + $0x78] sm:$0xff]
    %v364 = vld [vmem:[#allocation12 + $0x80] sm:$0xff]
    %v365 = vld [vmem:[#allocation12 + $0x88] sm:$0xff]
    %v366 = vld [vmem:[#allocation12 + $0x90] sm:$0xff]
    %v367 = vld [vmem:[#allocation12 + $0x98] sm:$0xff]
    %v368 = vld [vmem:[#allocation12 + $0xa0] sm:$0xff]
    %v369 = vld [vmem:[#allocation12 + $0xa8] sm:$0xff]
    %v370 = vld [vmem:[#allocation12 + $0xb0] sm:$0xff]
    %v371 = vld [vmem:[#allocation12 + $0xb8] sm:$0xff]
    %v372 = vld [vmem:[#allocation12 + $0xc0] sm:$0xff]
    %v373 = vld [vmem:[#allocation12 + $0xc8] sm:$0xff]
    %v374 = vld [vmem:[#allocation12 + $0xd0] sm:$0xff]
    %v375 = vld [vmem:[#allocation12 + $0xd8] sm:$0xff]
    %v376 = vld [vmem:[#allocation12 + $0xe0] sm:$0xff]
    %v377 = vld [vmem:[#allocation12 + $0xe8] sm:$0xff]
    %v378 = vld [vmem:[#allocation12 + $0xf0] sm:$0xff]
    %v379 = vld [vmem:[#allocation12 + $0xf8] sm:$0xff]
    %v380 = vpack.c.bf16 %v346, %v344
    %v381 = vpack.c.bf16 %v347, %v345
    %v383 = vlaneseq
    %v384 = vshrl.u32 %v383, 7
    %v385 = vsub.s32 0, %v384
    %v386 = vrot.slane %v158, %v385
    %v387 = vlaneseq
    %v388 = vshrl.u32 %v387, 7
    %v389 = vsub.s32 1, %v388
    %v390 = vrot.slane %v158, %v389
    %393 = vmatprep.subr.bf16.mxu0 %v349
    %394 = vmatpush1.bf16.msra.mxu0 %v348
    %395 = vmatprep.subr.bf16.mxu0 %v351
    %396 = vmatpush1.bf16.msra.mxu0 %v350
    %397 = vmatprep.subr.bf16.mxu0 %v353
    %398 = vmatpush1.bf16.msra.mxu0 %v352
    %399 = vmatprep.subr.bf16.mxu0 %v355
    %400 = vmatpush1.bf16.msra.mxu0 %v354
    %401 = vmatprep.subr.bf16.mxu0 %v357
    %402 = vmatpush1.bf16.msra.mxu0 %v356
    %403 = vmatprep.subr.bf16.mxu0 %v359
    %404 = vmatpush1.bf16.msra.mxu0 %v358
    %405 = vmatprep.subr.bf16.mxu0 %v361
    %406 = vmatpush1.bf16.msra.mxu0 %v360
    %407 = vmatprep.subr.bf16.mxu0 %v363
    %408 = vmatpush1.bf16.msra.mxu0 %v362
    %409 = vmatprep.subr.bf16.mxu0 %v365
    %410 = vmatpush1.bf16.msra.mxu0 %v364
    %411 = vmatprep.subr.bf16.mxu0 %v367
    %412 = vmatpush1.bf16.msra.mxu0 %v366
    %413 = vmatprep.subr.bf16.mxu0 %v369
    %414 = vmatpush1.bf16.msra.mxu0 %v368
    %415 = vmatprep.subr.bf16.mxu0 %v371
    %416 = vmatpush1.bf16.msra.mxu0 %v370
    %417 = vmatprep.subr.bf16.mxu0 %v373
    %418 = vmatpush1.bf16.msra.mxu0 %v372
    %419 = vmatprep.subr.bf16.mxu0 %v375
    %420 = vmatpush1.bf16.msra.mxu0 %v374
    %421 = vmatprep.subr.bf16.mxu0 %v377
    %422 = vmatpush1.bf16.msra.mxu0 %v376
    %423 = vmatprep.subr.bf16.mxu0 %v379
    %424 = vmatpush1.bf16.msra.mxu0 %v378
    %425 = vmatprep.mubr.bf16.mxu0 %v381
    %426 = vmatmul.mubr.bf16.gmra.mrb[0].mxu0 %v380
    %v427 = vpop.f32.mrb[0].mxu0
    %v428 = vadd.f32 %v386, %v427
    %v429 = vpop.f32.mrb[0].mxu0
    %v430 = vadd.f32 %v390, %v429
    %v431 = vpop.f32.mrb[0].mxu0
    %v432 = vadd.f32 %v386, %v431
    %v433 = vpop.f32.mrb[0].mxu0
    %v434 = vadd.f32 %v390, %v433
    %435 = vdwg.mxu0
    %v436 = vmax.f32 %v428, 0.0
    %v437 = vmax.f32 %v430, 0.0
    %v438 = vmax.f32 %v432, 0.0
    %v439 = vmax.f32 %v434, 0.0
    %v440 = vld [vmem:[#allocation14] sm:$0xff]
    %v441 = vld [vmem:[#allocation14 + $0x8] sm:$0xff]
    %v442 = vld [vmem:[#allocation14 + $0x10] sm:$0xff]
    %v443 = vld [vmem:[#allocation14 + $0x18] sm:$0xff]
    %v444 = vld [vmem:[#allocation14 + $0x20] sm:$0xff]
    %v445 = vld [vmem:[#allocation14 + $0x28] sm:$0xff]
    %v446 = vld [vmem:[#allocation14 + $0x30] sm:$0xff]
    %v447 = vld [vmem:[#allocation14 + $0x38] sm:$0xff]
    %v448 = vld [vmem:[#allocation14 + $0x40] sm:$0xff]
    %v449 = vld [vmem:[#allocation14 + $0x48] sm:$0xff]
    %v450 = vld [vmem:[#allocation14 + $0x50] sm:$0xff]
    %v451 = vld [vmem:[#allocation14 + $0x58] sm:$0xff]
    %v452 = vld [vmem:[#allocation14 + $0x60] sm:$0xff]
    %v453 = vld [vmem:[#allocation14 + $0x68] sm:$0xff]
    %v454 = vld [vmem:[#allocation14 + $0x70] sm:$0xff]
    %v455 = vld [vmem:[#allocation14 + $0x78] sm:$0xff]
    %v456 = vpack.c.bf16 %v438, %v436
    %v457 = vpack.c.bf16 %v439, %v437
    %458 = vmatprep.subr.bf16.mxu0 0
    %459 = vmatpush1.bf16.msra.mxu0 %v440
    %460 = vmatprep.subr.bf16.mxu0 0
    %461 = vmatpush1.bf16.msra.mxu0 %v441
    %462 = vmatprep.subr.bf16.mxu0 0
    %463 = vmatpush1.bf16.msra.mxu0 %v442
    %464 = vmatprep.subr.bf16.mxu0 0
    %465 = vmatpush1.bf16.msra.mxu0 %v443
    %466 = vmatprep.subr.bf16.mxu0 0
    %467 = vmatpush1.bf16.msra.mxu0 %v444
    %468 = vmatprep.subr.bf16.mxu0 0
    %469 = vmatpush1.bf16.msra.mxu0 %v445
    %470 = vmatprep.subr.bf16.mxu0 0
    %471 = vmatpush1.bf16.msra.mxu0 %v446
    %472 = vmatprep.subr.bf16.mxu0 0
    %473 = vmatpush1.bf16.msra.mxu0 %v447
    %474 = vmatprep.subr.bf16.mxu0 0
    %475 = vmatpush1.bf16.msra.mxu0 %v448
    %476 = vmatprep.subr.bf16.mxu0 0
    %477 = vmatpush1.bf16.msra.mxu0 %v449
    %478 = vmatprep.subr.bf16.mxu0 0
    %479 = vmatpush1.bf16.msra.mxu0 %v450
    %480 = vmatprep.subr.bf16.mxu0 0
    %481 = vmatpush1.bf16.msra.mxu0 %v451
    %482 = vmatprep.subr.bf16.mxu0 0
    %483 = vmatpush1.bf16.msra.mxu0 %v452
    %484 = vmatprep.subr.bf16.mxu0 0
    %485 = vmatpush1.bf16.msra.mxu0 %v453
    %486 = vmatprep.subr.bf16.mxu0 0
    %487 = vmatpush1.bf16.msra.mxu0 %v454
    %488 = vmatprep.subr.bf16.mxu0 0
    %489 = vmatpush1.bf16.msra.mxu0 %v455
    %490 = vmatprep.mubr.bf16.mxu0 %v457
    %491 = vmatmul.mubr.bf16.gmra.mrb[0].mxu0 %v456
    %v492 = vpop.f32.mrb[0].mxu0
    %v493 = vadd.f32 %v159, %v492
    %v494 = vpop.f32.mrb[0].mxu0
    %v495 = vpop.f32.mrb[0].mxu0
    %v496 = vadd.f32 %v159, %v495
    %v497 = vpop.f32.mrb[0].mxu0
    %498 = vdwg.mxu0
    %v499 = vmax.f32 %v493, 0.0
    %v500 = vmax.f32 %v496, 0.0
    %v501 = vld [vmem:[#allocation15] sm:$0xff]
    %v502 = vld [vmem:[#allocation15 + $0x8] sm:$0xff]
    %v503 = vld [vmem:[#allocation15 + $0x10] sm:$0xff]
    %v504 = vld [vmem:[#allocation15 + $0x18] sm:$0xff]
    %v505 = vld [vmem:[#allocation15 + $0x20] sm:$0xff]
    %v506 = vld [vmem:[#allocation15 + $0x28] sm:$0xff]
    %v507 = vld [vmem:[#allocation15 + $0x30] sm:$0xff]
    %v508 = vld [vmem:[#allocation15 + $0x38] sm:$0xff]
    %v509 = vpack.c.bf16 %v500, %v499
    %510 = vmatprep.subr.bf16.mxu0 0
    %511 = vmatpush1.bf16.msra.mxu0 %v501
    %512 = vmatprep.subr.bf16.mxu0 0
    %513 = vmatpush1.bf16.msra.mxu0 %v502
    %514 = vmatprep.subr.bf16.mxu0 0
    %515 = vmatpush1.bf16.msra.mxu0 %v503
    %516 = vmatprep.subr.bf16.mxu0 0
    %517 = vmatpush1.bf16.msra.mxu0 %v504
    %518 = vmatprep.subr.bf16.mxu0 0
    %519 = vmatpush1.bf16.msra.mxu0 %v505
    %520 = vmatprep.subr.bf16.mxu0 0
    %521 = vmatpush1.bf16.msra.mxu0 %v506
    %522 = vmatprep.subr.bf16.mxu0 0
    %523 = vmatpush1.bf16.msra.mxu0 %v507
    %524 = vmatprep.subr.bf16.mxu0 0
    %525 = vmatpush1.bf16.msra.mxu0 %v508
    %526 = vmatprep.subr.bf16.mxu0 0
    %527 = vmatpush1.bf16.msra.mxu0 0
    %528 = vmatprep.subr.bf16.mxu0 0
    %529 = vmatpush1.bf16.msra.mxu0 0
    %530 = vmatprep.subr.bf16.mxu0 0
    %531 = vmatpush1.bf16.msra.mxu0 0
    %532 = vmatprep.subr.bf16.mxu0 0
    %533 = vmatpush1.bf16.msra.mxu0 0
    %534 = vmatprep.subr.bf16.mxu0 0
    %535 = vmatpush1.bf16.msra.mxu0 0
    %536 = vmatprep.subr.bf16.mxu0 0
    %537 = vmatpush1.bf16.msra.mxu0 0
    %538 = vmatprep.subr.bf16.mxu0 0
    %539 = vmatpush1.bf16.msra.mxu0 0
    %540 = vmatprep.subr.bf16.mxu0 0
    %541 = vmatpush1.bf16.msra.mxu0 0
    %542 = vmatprep.mubr.bf16.mxu0 0
    %543 = vmatmul.mubr.bf16.gmra.mrb[0].mxu0 %v509
    %v544 = vpop.f32.mrb[0].mxu0
    %v545 = vadd.f32 %v160, %v544
    %v546 = vpop.f32.mrb[0].mxu0
    %v547 = vpop.f32.mrb[0].mxu0
    %v548 = vadd.f32 %v160, %v547
    %v549 = vpop.f32.mrb[0].mxu0
    %550 = vdwg.mxu0
    %v551 = vmax.f32 %v545, 0.0
    %v552 = vmax.f32 %v548, 0.0
    %v553 = vld [vmem:[#allocation17] sm:$0xff]
    %v554 = vld [vmem:[#allocation17 + $0x8] sm:$0xff]
    %v555 = vld [vmem:[#allocation17 + $0x10] sm:$0xff]
    %v556 = vld [vmem:[#allocation17 + $0x18] sm:$0xff]
    %v557 = vld [vmem:[#allocation17 + $0x20] sm:$0xff]
    %v558 = vld [vmem:[#allocation17 + $0x28] sm:$0xff]
    %v559 = vld [vmem:[#allocation17 + $0x30] sm:$0xff]
    %v560 = vld [vmem:[#allocation17 + $0x38] sm:$0xff]
    %v561 = vpack.c.bf16 %v552, %v551
    %562 = vmatprep.subr.bf16.mxu0 0
    %563 = vmatpush1.bf16.msra.mxu0 %v553
    %564 = vmatprep.subr.bf16.mxu0 0
    %565 = vmatpush1.bf16.msra.mxu0 %v554
    %566 = vmatprep.subr.bf16.mxu0 0
    %567 = vmatpush1.bf16.msra.mxu0 %v555
    %568 = vmatprep.subr.bf16.mxu0 0
    %569 = vmatpush1.bf16.msra.mxu0 %v556
    %570 = vmatprep.subr.bf16.mxu0 0
    %571 = vmatpush1.bf16.msra.mxu0 %v557
    %572 = vmatprep.subr.bf16.mxu0 0
    %573 = vmatpush1.bf16.msra.mxu0 %v558
    %574 = vmatprep.subr.bf16.mxu0 0
    %575 = vmatpush1.bf16.msra.mxu0 %v559
    %576 = vmatprep.subr.bf16.mxu0 0
    %577 = vmatpush1.bf16.msra.mxu0 %v560
    %578 = vmatprep.subr.bf16.mxu0 0
    %579 = vmatpush1.bf16.msra.mxu0 0
    %580 = vmatprep.subr.bf16.mxu0 0
    %581 = vmatpush1.bf16.msra.mxu0 0
    %582 = vmatprep.subr.bf16.mxu0 0
    %583 = vmatpush1.bf16.msra.mxu0 0
    %584 = vmatprep.subr.bf16.mxu0 0
    %585 = vmatpush1.bf16.msra.mxu0 0
    %586 = vmatprep.subr.bf16.mxu0 0
    %587 = vmatpush1.bf16.msra.mxu0 0
    %588 = vmatprep.subr.bf16.mxu0 0
    %589 = vmatpush1.bf16.msra.mxu0 0
    %590 = vmatprep.subr.bf16.mxu0 0
    %591 = vmatpush1.bf16.msra.mxu0 0
    %592 = vmatprep.subr.bf16.mxu0 0
    %593 = vmatpush1.bf16.msra.mxu0 0
    %594 = vmatprep.mubr.bf16.mxu0 0
    %595 = vmatmul.mubr.bf16.gmra.mrb[0].mxu0 %v561
    %v596 = vpop.f32.mrb[0].mxu0
    %v597 = vadd.f32 %v161, %v596
    %v598 = vpop.f32.mrb[0].mxu0
    %v599 = vpop.f32.mrb[0].mxu0
    %v600 = vadd.f32 %v161, %v599
    %v601 = vpop.f32.mrb[0].mxu0
    %602 = vdwg.mxu0
    %603 = vmax.xlane.f32.xlu0 %v597
    %v604 = vpop.xlane.xlu0 %603
    %605 = vmax.xlane.f32.xlu0 %v600
    %v606 = vpop.xlane.xlu0 %605
    %v607 = vsub.f32 %v597, %v604
    %v608 = vsub.f32 %v600, %v606
    %v609 = vmul.f32 %v607, 1.442695
    %v610 = vpow.pop %v609
    %v611 = vmul.f32 %v608, 1.442695
    %v612 = vpow.pop %v611
    %613 = vadd.xlane.f32.xlu0 %v610
    %v614 = vpop.xlane.xlu0 %613
    %615 = vadd.xlane.f32.xlu0 %v612
    %v616 = vpop.xlane.xlu0 %615
    %v617 = vlog2.pop %v614
    %v618 = vmul.f32 %v617, 0.6931472
    %v619 = vlog2.pop %v616
    %v620 = vmul.f32 %v619, 0.6931472
    %v621 = vsub.f32 %v607, %v618
    %v622 = vsub.f32 %v608, %v620
    %v623 = vpack.c.bf16 %v622, %v621
    %v625 = vunpack.c.l.b16 %v623
    %v626 = vunpack.c.h.b16 %v623
    %v627 = vpack.c.b16 %v625, %v625
    %v628 = vpack.c.b16 %v626, %v626
    %631 = vst [vmem:[%s10] sm:$0xf] %v627
    %632 = vst [vmem:[%s10 + $0x4] sm:$0xf] %v628
    // Predicated region
    $region66: #{_lambda_.2} parent=1 // pred_check
      _
    $region67: #{_lambda_.2} parent=1 // pred_check_branch
      %634 = sbr.rel (0) target = $region69
    $region68: #{_lambda_.2} parent=1 // pred_region
      _
    $region69: #{_lambda_.2} parent=1 // pred_fallthru
      _
    // Predicated region
    $region70: #{_lambda_.2} parent=1 // pred_check
      _
    $region71: #{_lambda_.2} parent=1 // pred_check_branch
      %636 = sbr.rel (0) target = $region73
    $region72: #{_lambda_.2} parent=1 // pred_region
      _
    $region73: #{_lambda_.2} parent=1 // pred_fallthru
      _
    %637 = vsyncpa [#allocation8], 1
    %638 = vsyncpa [#allocation10], 1
    %639 = vsyncpa [#allocation13], 1
    %640 = vsyncpa [#allocation16], 1

</llo_original>
